<compile_context>
chip_gen: v5e
topology: v5e:2x2
jax: 0.10.0
libtpu: 0.0.40
codegen_flags: <defaults>
</compile_context>

<pallas_src>
import jax
import jax.numpy as jnp
from jax.experimental import pallas as pl
from jax.experimental.pallas import tpu as pltpu


def _round_up(v, m):
    return (v + m - 1) // m * m


def _linear_kernel(x_ref, wt_ref, b_ref, o_ref):
    # x_ref:  (tm, C)   activation tile (full contraction dim)
    # wt_ref: (C,  Np)  W^T, padded on N, VMEM-resident across the whole grid
    # b_ref:  (1,  Np)  bias, VMEM-resident
    # o_ref:  (tm, Np)  output tile (lane-dense)
    acc = jnp.dot(x_ref[...], wt_ref[...], preferred_element_type=jnp.float32)
    o_ref[...] = (acc + b_ref[...].astype(jnp.float32)).astype(o_ref.dtype)


def lossmodel_forward(x, weight, bias):
    """Pallas TPU equivalent of lossmodel.forward.

    x:      (B, C)
    weight: (C, C)  PyTorch Linear convention (out_features, in_features)
    bias:   (C,)
    """
    B, C = x.shape
    out_dtype = x.dtype
    itemsize = jnp.dtype(out_dtype).itemsize

    # Sublane alignment: 8 rows for 32-bit dtypes, 16 for packed 16-bit dtypes (bf16).
    sub = 8 if itemsize >= 4 else 16

    Np = _round_up(C, 128)                    # lane-dense output / resident-weight N
    tm = min(512, _round_up(B, sub))          # batch tile

    # v7x megacore: make sure the parallel M axis has >= 2 blocks when there is
    # enough work (one extra grid step is noise on v5e/v6e).
    if pl.cdiv(B, tm) < 2 and B >= 2 * sub:
        tm = _round_up((B + 1) // 2, sub)
    grid_m = pl.cdiv(B, tm)

    # One-time, tiny transforms of the (C, C) weight and (C,) bias.
    wt = jnp.pad(weight.T, ((0, 0), (0, Np - C)))        # (C, Np), standard contraction
    bp = jnp.pad(bias, (0, Np - C)).reshape(1, Np)       # (1, Np)

    # VMEM: double-buffered x + output tiles, resident W^T + bias, ~2x headroom,
    # capped at 32 MiB (safe on v7x's 64 MiB physical VMEM).
    need = (2 * tm * C + 2 * tm * Np + C * Np + Np) * itemsize
    vmem_limit = int(min(max(2 * need, 4 * 2**20), 32 * 2**20))

    cost = pl.CostEstimate(
        flops=2 * B * Np * C,
        transcendentals=0,
        bytes_accessed=itemsize * (B * C + C * Np + Np + B * Np),
    )

    out_padded = pl.pallas_call(
        _linear_kernel,
        out_shape=jax.ShapeDtypeStruct((B, Np), out_dtype),
        grid_spec=pltpu.PrefetchScalarGridSpec(
            num_scalar_prefetch=0,
            grid=(grid_m,),
            in_specs=[
                pl.BlockSpec((tm, C), lambda i: (i, 0)),   # x: tiled over M, full K
                pl.BlockSpec((C, Np), lambda i: (0, 0)),   # W^T: fetched once, resident
                pl.BlockSpec((1, Np), lambda i: (0, 0)),   # bias: fetched once, resident
            ],
            out_specs=pl.BlockSpec((tm, Np), lambda i: (i, 0)),
        ),
        compiler_params=pltpu.CompilerParams(
            dimension_semantics=("parallel",),
            vmem_limit_bytes=vmem_limit,
        ),
        cost_estimate=cost,
    )(x, wt, bp)

    if Np == C:
        return out_padded
    return out_padded[:, :C]


def make_params(n_clusters, key):
    """Deterministic params matching lossmodel.__init__:
    orthogonal_ weight, zeros_ bias (dropout has no params, rate forced to 0)."""
    m = jax.random.normal(key, (n_clusters, n_clusters), dtype=jnp.float32)
    q, r = jnp.linalg.qr(m)
    # sign-fix so the orthogonal matrix is uniquely determined (like torch orthogonal_)
    q = q * jnp.sign(jnp.diag(r))[None, :]
    weight = q.astype(jnp.float32)              # (n_clusters, n_clusters), orthogonal
    bias = jnp.zeros((n_clusters,), jnp.float32)
    return weight, bias


if __name__ == "__main__":
    n_clusters = 32
    batch = 8

    key = jax.random.PRNGKey(0)
    kx, kw = jax.random.split(key)

    x = jax.random.normal(kx, (batch, n_clusters), dtype=jnp.float32)
    weight, bias = make_params(n_clusters, kw)

    out = lossmodel_forward(x, weight, bias)
    out = jax.block_until_ready(out)

    # reference check (pure JAX): y = x @ W.T + b  (dropout p=0 is identity)
    ref = x @ weight.T + bias[None, :]
    assert out.shape == (batch, n_clusters)
    assert jnp.allclose(out, ref, atol=1e-5, rtol=1e-5)

    print("KERNEL_OK")
</pallas_src>

<mosaic_0001>
module attributes {stable_mosaic.version = 11 : i64} {
  func.func @_linear_kernel(%arg0: i32, %arg1: memref<8x32xf32, #tpu.memory_space<vmem>>, %arg2: memref<32x128xf32, #tpu.memory_space<vmem>>, %arg3: memref<1x128xf32, #tpu.memory_space<vmem>>, %arg4: memref<8x128xf32, #tpu.memory_space<vmem>>) attributes {dimension_semantics = [#tpu.dimension_semantics<parallel>], iteration_bounds = array<i64: 1>, scalar_prefetch = 0 : i64, scratch_operands = 0 : i64, tpu.core_type = #tpu.core_type<tc>, window_params = [{transform_indices = @transform_0, window_bounds = array<i64: 8, 32>}, {pipeline_mode = #tpu.pipeline_mode<synchronous>, transform_indices = @transform_1, window_bounds = array<i64: 32, 128>}, {pipeline_mode = #tpu.pipeline_mode<synchronous>, transform_indices = @transform_2, window_bounds = array<i64: 1, 128>}, {transform_indices = @transform_3, window_bounds = array<i64: 8, 128>}]} {
    %c0 = arith.constant 0 : index
    %c0_0 = arith.constant 0 : index
    %0 = vector.load %arg1[%c0, %c0_0] : memref<8x32xf32, #tpu.memory_space<vmem>>, vector<8x32xf32>
    %c0_1 = arith.constant 0 : index
    %c0_2 = arith.constant 0 : index
    %1 = vector.load %arg2[%c0_1, %c0_2] : memref<32x128xf32, #tpu.memory_space<vmem>>, vector<32x128xf32>
    %cst = arith.constant dense<0.000000e+00> : vector<8x128xf32>
    %2 = tpu.matmul %0, %1, %cst {dimension_numbers = #tpu.dot_dimension_numbers<[1], [0], [0], [1], [0, 0, 1, 1], [], []>} : vector<8x32xf32>, vector<32x128xf32>, vector<8x128xf32> -> vector<8x128xf32>
    %c0_3 = arith.constant 0 : index
    %c0_4 = arith.constant 0 : index
    %3 = vector.load %arg3[%c0_3, %c0_4] : memref<1x128xf32, #tpu.memory_space<vmem>>, vector<1x128xf32>
    %4 = vector.broadcast %3 : vector<1x128xf32> to vector<8x128xf32>
    %5 = arith.addf %2, %4 : vector<8x128xf32>
    %c0_5 = arith.constant 0 : index
    %c0_6 = arith.constant 0 : index
    %6 = vector.load %arg4[%c0_5, %c0_6] : memref<8x128xf32, #tpu.memory_space<vmem>>, vector<8x128xf32>
    tpu.vector_store %arg4[%c0_5, %c0_6], %5 {strides = array<i32>} : memref<8x128xf32, #tpu.memory_space<vmem>>, vector<8x128xf32>,
    return
  }
  func.func @transform_0(%arg0: i32) -> (i32, i32) {
    %c0_i32 = arith.constant 0 : i32
    %c0_i32_0 = arith.constant 0 : i32
    return %arg0, %c0_i32 : i32, i32
  }
  func.func @transform_1(%arg0: i32) -> (i32, i32) {
    %c0_i32 = arith.constant 0 : i32
    %c0_i32_0 = arith.constant 0 : i32
    %c0_i32_1 = arith.constant 0 : i32
    return %c0_i32, %c0_i32_0 : i32, i32
  }
  func.func @transform_2(%arg0: i32) -> (i32, i32) {
    %c0_i32 = arith.constant 0 : i32
    %c0_i32_0 = arith.constant 0 : i32
    %c0_i32_1 = arith.constant 0 : i32
    return %c0_i32, %c0_i32_0 : i32, i32
  }
  func.func @transform_3(%arg0: i32) -> (i32, i32) {
    %c0_i32 = arith.constant 0 : i32
    %c0_i32_0 = arith.constant 0 : i32
    return %arg0, %c0_i32 : i32, i32
  }
}

</mosaic_0001>

<llo_original>
// kernel: tpu_custom_call.1
$region0: #{tpu_custom_call.1}
  #allocation0 [shape = 'u32[]', space=smem, size = 0x4, offset = 0x4, fixed_abs, tag = 'smem constant byte address 0x4 - core index']
  #allocation1 [shape = 'u32[72,128]{1,0:T(1,128)}', space=vmem, size = 0x9000, scoped, tag = 'internal scratch']
  %s0 = inlined_call_operand.hbm [shape: f32[8,32], index: 0, kind: input, shape index: {}]
  %s1 = inlined_call_operand.hbm [shape: f32[32,128], index: 1, kind: input, shape index: {}]
  %s2 = inlined_call_operand.vmem [shape: f32[1,128], index: 2, kind: input, shape index: {}]
  %s3 = inlined_call_operand.hbm [shape: f32[8,128], index: 3, kind: output, shape index: {}]
  %s4 = sld [smem:[#allocation0]]
  $region30: #{tpu_custom_call.1} parent=0
    _
  %s6 = ssub.s32 1, %s4
  %s7 = scalar_select 0, %s6, %s4
  $region1: #{tpu_custom_call.1} parent=0
    #allocation2 [shape = 'u8[4096]{0}', space=vmem, size = 0x1000, scoped, tag = 'input window, operand 0, single buffered']
    #allocation3 [shape = 's32[1]{0}', space=sflag, size = 0x4, scoped, tag = 'scoped memory for tpu_custom_call.1']
    #allocation4 [shape = 's32[1]{0}', space=sflag, size = 0x4, scoped, tag = 'scoped memory for tpu_custom_call.1']
    #allocation5 [shape = 'u8[16384]{0}', space=vmem, size = 0x4000, scoped, tag = 'input window, operand 1, single buffered']
    #allocation6 [shape = 's32[1]{0}', space=sflag, size = 0x4, scoped, tag = 'scoped memory for tpu_custom_call.1']
    #allocation7 [shape = 'u8[4096]{0}', space=vmem, size = 0x1000, scoped, tag = 'output window, operand 0, single buffered']
    %8 = vsyncpa [#allocation3], 0
    %9 = vsyncpa [#allocation6], 0
    %10 = vsyncpa [#allocation4], 0
    // Predicated region
    $region2: #{tpu_custom_call.1} parent=1 // pred_check
      _
    $region3: #{tpu_custom_call.1} parent=1 // pred_check_branch
      %12 = sbr.rel (0) target = $region5
    $region4: #{tpu_custom_call.1} parent=1 // pred_region
      %14 = vsyncadd [#allocation3], 0
      %s16 = sshll.u32 %s0, 4
      %s17 = int_to_ptr.hbm [resolvable:$true] %s16
      %s18 = sshll.u32 [#allocation2], 4
      %s19 = int_to_ptr.vmem [resolvable:$true] %s18
      %21 = dma.hbm_to_vmem [thread:$0]  %s17, 128, %s19, [#allocation3]
    $region5: #{tpu_custom_call.1} parent=1 // pred_fallthru
      _
    // Predicated region
    $region6: #{tpu_custom_call.1} parent=1 // pred_check
      _
    $region7: #{tpu_custom_call.1} parent=1 // pred_check_branch
      %23 = sbr.rel (0) target = $region9
    $region8: #{tpu_custom_call.1} parent=1 // pred_region
      %25 = vsyncadd [#allocation6], 0
      %s26 = sshll.u32 %s1, 4
      %s27 = int_to_ptr.hbm [resolvable:$true] %s26
      %s28 = sshll.u32 [#allocation5], 4
      %s29 = int_to_ptr.vmem [resolvable:$true] %s28
      %34 = dma.hbm_to_vmem [thread:$0]  %s27, 512, %s29, [#allocation6], 128, 128, 8
    $region9: #{tpu_custom_call.1} parent=1 // pred_fallthru
      _
    // Predicated region
    $region10: #{tpu_custom_call.1} parent=1 // pred_check
      _
    $region11: #{tpu_custom_call.1} parent=1 // pred_check_branch
      %36 = sbr.rel (0) target = $region13
    $region12: #{tpu_custom_call.1} parent=1 // pred_region
      _
    $region13: #{tpu_custom_call.1} parent=1 // pred_fallthru
      _
    // Predicated region
    $region14: #{tpu_custom_call.1} parent=1 // pred_check
      _
    $region15: #{tpu_custom_call.1} parent=1 // pred_check_branch
      %38 = sbr.rel (0) target = $region17
    $region16: #{tpu_custom_call.1} parent=1 // pred_region
      %40 = dma.done [#allocation3], 128
    $region17: #{tpu_custom_call.1} parent=1 // pred_fallthru
      _
    // Predicated region
    $region18: #{tpu_custom_call.1} parent=1 // pred_check
      _
    $region19: #{tpu_custom_call.1} parent=1 // pred_check_branch
      %42 = sbr.rel (0) target = $region21
    $region20: #{tpu_custom_call.1} parent=1 // pred_region
      %44 = dma.done [#allocation6], 512
    $region21: #{tpu_custom_call.1} parent=1 // pred_fallthru
      _
    %v45 = vld [vmem:[#allocation2] sm:$0xff]
    %v46 = vld [vmem:[#allocation5] sm:$0xff]
    %v47 = vld [vmem:[#allocation5 + $0x8] sm:$0xff]
    %v48 = vld [vmem:[#allocation5 + $0x10] sm:$0xff]
    %v49 = vld [vmem:[#allocation5 + $0x18] sm:$0xff]
    %v50 = vld [vmem:[%s2] sm:$0x1]
    %v52 = vperm.slane %v50, 0
    %vm54 = vcmask 261120
    %v56 = vsel %vm54, %v45, 0
    %58 = vmatpush.msra.mxu0 0.0
    %59 = vmatpush.msra.mxu0 0.0
    %60 = vmatpush.msra.mxu0 0.0
    %61 = vmatpush.msra.mxu0 0.0
    %62 = vmatpush.msra.mxu0 0.0
    %63 = vmatpush.msra.mxu0 0.0
    %64 = vmatpush.msra.mxu0 0.0
    %65 = vmatpush.msra.mxu0 0.0
    %66 = vmatpush.msra.mxu0 0.0
    %67 = vmatpush.msra.mxu0 0.0
    %68 = vmatpush.msra.mxu0 0.0
    %69 = vmatpush.msra.mxu0 0.0
    %70 = vmatpush.msra.mxu0 %v49
    %71 = vmatpush.msra.mxu0 %v48
    %72 = vmatpush.msra.mxu0 %v47
    %73 = vmatpush.msra.mxu0 %v46
    %74 = vmatmul.f32.gmra.mxu0 %v56
    %v75 = vpop.f32.mrf.mxu0
    %v76 = vadd.f32 %v52, %v75
    %77 = vdwg.mxu0
    %78 = vst [vmem:[#allocation7] sm:$0xff] %v76
    // Predicated region
    $region22: #{tpu_custom_call.1} parent=1 // pred_check
      _
    $region23: #{tpu_custom_call.1} parent=1 // pred_check_branch
      %80 = sbr.rel (0) target = $region25
    $region24: #{tpu_custom_call.1} parent=1 // pred_region
      %82 = vsyncadd [#allocation4], 0
      %s84 = sshll.u32 [#allocation7], 4
      %s85 = int_to_ptr.vmem [resolvable:$true] %s84
      %s86 = sshll.u32 %s3, 4
      %s87 = int_to_ptr.hbm [resolvable:$true] %s86
      %89 = dma.vmem_to_hbm [thread:$0]  %s85, 128, %s87, [#allocation4]
    $region25: #{tpu_custom_call.1} parent=1 // pred_fallthru
      _
    // Predicated region
    $region26: #{tpu_custom_call.1} parent=1 // pred_check
      _
    $region27: #{tpu_custom_call.1} parent=1 // pred_check_branch
      %91 = sbr.rel (0) target = $region29
    $region28: #{tpu_custom_call.1} parent=1 // pred_region
      %93 = dma.done [#allocation4], 128
    $region29: #{tpu_custom_call.1} parent=1 // pred_fallthru
      _
    %94 = vsyncpa [#allocation3], 1
    %95 = vsyncpa [#allocation6], 1
    %96 = vsyncpa [#allocation4], 1

</llo_original>
